<compile_context>
chip_gen: v5e
topology: v5e:2x2
jax: 0.10.0
libtpu: 0.0.40
codegen_flags: <defaults>
</compile_context>

<pallas_src>
import functools

import numpy as np
import jax
import jax.numpy as jnp
from jax.experimental import pallas as pl
from jax.experimental.pallas import tpu as pltpu


def _round_up(x, m):
    return (x + m - 1) // m * m


def _node_transform_kernel(tm_ref, x_ref, w_ref, o_ref, *,
                           num_types, use_activation):
    # tm_ref: (TN, 1) int32          x_ref: (TN, Dp) bf16 (constant-1 col at Dmax)
    # w_ref:  (T*Dp, Hp) bf16        o_ref: (TN, Hp) bf16
    x = x_ref[...]
    tm = tm_ref[...]
    # bf16 per-type input masks (types are disjoint; padding rows have tm = -1,
    # match nothing and stay zero), concatenated along K -> one MXU pass.
    parts = [jnp.where(tm == t, x, jnp.zeros_like(x)) for t in range(num_types)]
    xk = jnp.concatenate(parts, axis=1)                        # (TN, T*Dp) bf16
    y = jnp.dot(xk, w_ref[...], preferred_element_type=jnp.float32)
    if use_activation:
        y = jnp.maximum(y, 0.0)
    o_ref[...] = y.astype(o_ref.dtype)


def prepare_params(w_list, b_list, input_feature_dims, hidden_dim):
    """One-time (init-time) weight packing: pad K to a 128 multiple with one
    extra row for the folded bias, flatten the type axis along K, cast bf16."""
    num_types = len(w_list)
    d_max = int(max(input_feature_dims))
    dp = _round_up(d_max + 1, 128)          # +1 row holds the folded bias
    hp = _round_up(hidden_dim, 128)
    wp = np.zeros((num_types, dp, hp), np.float32)
    for t, d in enumerate(input_feature_dims):
        wp[t, :d, :hidden_dim] = np.asarray(w_list[t], np.float32)
        wp[t, d_max, :hidden_dim] = np.asarray(b_list[t], np.float32)  # bias row
    w_folded = jnp.asarray(wp.reshape(num_types * dp, hp), dtype=jnp.bfloat16)
    return w_folded, d_max, dp, hp


def _derive_vmem_limit(tn, dp, hp, num_types, out_itemsize):
    # Streams double-buffered by the default pipeline + in-kernel temporaries.
    x_tile = tn * dp * 2
    tm_tile = tn * 128 * 4                    # (TN,1) int32, lane-padded
    o_tile = tn * hp * out_itemsize
    w_res = num_types * dp * hp * 2           # resident bf16 weight slab
    temps = tn * num_types * dp * 2 + tn * hp * 4   # concat xk + f32 acc
    need = 2 * (x_tile + tm_tile + o_tile + w_res) + temps
    limit = int(1.5 * need) + (4 << 20)
    try:
        cap = int(0.75 * pltpu.get_tpu_info().vmem_capacity_bytes)
    except Exception:
        cap = 48 << 20                        # safe on v7x's 64 MiB VMEM
    return max(32 << 20, min(limit, cap))


def node_transform(type_mask_i32, x_pad, w_folded, *, num_types, d_max, dp, hp,
                   use_activation, tile_nodes=1024, out_dtype=jnp.bfloat16):
    """type_mask_i32: (N,1) int32; x_pad: (N, Dmax) float; w_folded: (T*Dp, Hp)
    bf16 from prepare_params.  Returns the padded (Np, Hp) result in out_dtype
    -- consumers should keep / fuse the [:N, :H] view rather than
    materializing a sliced device copy."""
    n = x_pad.shape[0]
    tn = min(tile_nodes, _round_up(n, 16))    # multiple of 16: bf16 packs [16,128]
    np_rows = _round_up(n, tn)

    # Padded bf16 x built directly in bf16, with the constant-1 bias column.
    xp = jnp.zeros((np_rows, dp), jnp.bfloat16)
    xp = xp.at[:n, :d_max].set(x_pad.astype(jnp.bfloat16))
    xp = xp.at[:n, d_max].set(jnp.asarray(1.0, jnp.bfloat16))
    tmp = jnp.full((np_rows, 1), -1, jnp.int32).at[:n, :].set(type_mask_i32)

    kernel = functools.partial(_node_transform_kernel,
                               num_types=num_types,
                               use_activation=use_activation)

    vmem_limit = _derive_vmem_limit(tn, dp, hp, num_types,
                                    np.dtype(out_dtype).itemsize)

    out = pl.pallas_call(
        kernel,
        out_shape=jax.ShapeDtypeStruct((np_rows, hp), out_dtype),
        grid_spec=pltpu.PrefetchScalarGridSpec(
            num_scalar_prefetch=0,
            grid=(np_rows // tn,),
            in_specs=[
                pl.BlockSpec((tn, 1), lambda i: (i, 0)),               # type mask tile
                pl.BlockSpec((tn, dp), lambda i: (i, 0)),              # node features
                pl.BlockSpec((num_types * dp, hp), lambda i: (0, 0)),  # resident weights
            ],
            out_specs=pl.BlockSpec((tn, hp), lambda i: (i, 0)),
        ),
        compiler_params=pltpu.CompilerParams(
            dimension_semantics=("parallel",),
            vmem_limit_bytes=vmem_limit,
        ),
    )(tmp, xp, w_folded)

    return out


if __name__ == "__main__":
    # ---- module config (small, consistent with NodeTransform.__init__) ----
    input_feature_dims = [10, 6, 12]   # one Linear per node type
    hidden_dim = 32
    use_activation = True
    num_types = len(input_feature_dims)
    d_max = max(input_feature_dims)

    # type_mask: 24 nodes, 8 of each type, interleaved
    type_mask = np.array([0, 1, 2] * 8, dtype=np.int32)
    num_nodes = type_mask.shape[0]

    # ---- deterministic parameters / inputs ----
    key = jax.random.PRNGKey(0)
    keys = jax.random.split(key, 3 * num_types)

    features = []
    for i, d in enumerate(input_feature_dims):
        n_i = int((type_mask == i).sum())
        features.append(jax.random.normal(keys[i], (n_i, d), dtype=jnp.float32))

    w_list, b_list = [], []
    for i, d in enumerate(input_feature_dims):
        bound = 1.0 / np.sqrt(d)
        w = jax.random.uniform(keys[num_types + i], (d, hidden_dim),
                               minval=-bound, maxval=bound, dtype=jnp.float32)
        b = jax.random.uniform(keys[2 * num_types + i], (hidden_dim,),
                               minval=-bound, maxval=bound, dtype=jnp.float32)
        w_list.append(w)
        b_list.append(b)

    # ---- init-time packing (hoisted out of the per-call path) ----
    w_folded, d_max_p, dp, hp = prepare_params(w_list, b_list,
                                               input_feature_dims, hidden_dim)

    # ---- per-call glue: scatter features into a dense (N, Dmax) matrix ----
    x_pad_np = np.zeros((num_nodes, d_max), dtype=np.float32)
    for i, d in enumerate(input_feature_dims):
        idx = np.where(type_mask == i)[0]
        x_pad_np[idx, :d] = np.asarray(features[i])
    x_pad = jnp.asarray(x_pad_np)
    type_mask_i32 = jnp.asarray(type_mask, dtype=jnp.int32)[:, None]  # (N, 1)

    # ---- run kernel (returns padded (Np, Hp) bf16) ----
    out_pad = node_transform(type_mask_i32, x_pad, w_folded,
                             num_types=num_types, d_max=d_max_p, dp=dp, hp=hp,
                             use_activation=use_activation)
    out_pad = jax.block_until_ready(out_pad)
    # Host-side view of the valid region (no extra device copy).
    out = np.asarray(out_pad)[:num_nodes, :hidden_dim].astype(np.float32)

    # ---- pure reference (PyTorch forward, eval-mode dropout) ----
    ref = np.zeros((num_nodes, hidden_dim), dtype=np.float32)
    for i in range(num_types):
        idx = np.where(type_mask == i)[0]
        ref[idx] = np.asarray(features[i] @ w_list[i] + b_list[i])
    if use_activation:
        ref = np.maximum(ref, 0.0)

    # bf16 x / W / folded bias / output with f32 MXU accumulation -> loosened
    # tolerance vs the f32 reference.
    np.testing.assert_allclose(out, ref, rtol=4e-2, atol=4e-2)
    print("KERNEL_OK")
</pallas_src>

<mosaic_0001>
module attributes {stable_mosaic.version = 11 : i64} {
  func.func @_node_transform_kernel(%arg0: i32, %arg1: memref<32x1xi32, #tpu.memory_space<vmem>>, %arg2: memref<32x128xbf16, #tpu.memory_space<vmem>>, %arg3: memref<384x128xbf16, #tpu.memory_space<vmem>>, %arg4: memref<32x128xbf16, #tpu.memory_space<vmem>>) attributes {dimension_semantics = [#tpu.dimension_semantics<parallel>], iteration_bounds = array<i64: 1>, scalar_prefetch = 0 : i64, scratch_operands = 0 : i64, tpu.core_type = #tpu.core_type<tc>, window_params = [{transform_indices = @transform_0, window_bounds = array<i64: 32, 1>}, {transform_indices = @transform_1, window_bounds = array<i64: 32, 128>}, {pipeline_mode = #tpu.pipeline_mode<synchronous>, transform_indices = @transform_2, window_bounds = array<i64: 384, 128>}, {transform_indices = @transform_3, window_bounds = array<i64: 32, 128>}]} {
    %c0 = arith.constant 0 : index
    %c0_0 = arith.constant 0 : index
    %0 = vector.load %arg2[%c0, %c0_0] : memref<32x128xbf16, #tpu.memory_space<vmem>>, vector<32x128xbf16>
    %c0_1 = arith.constant 0 : index
    %c0_2 = arith.constant 0 : index
    %1 = vector.load %arg1[%c0_1, %c0_2] : memref<32x1xi32, #tpu.memory_space<vmem>>, vector<32x1xi32>
    %c0_i32 = arith.constant 0 : i32
    %2 = vector.broadcast %c0_i32 : i32 to vector<32x1xi32>
    %3 = arith.cmpi eq, %1, %2 : vector<32x1xi32>
    %cst = arith.constant 0.000000e+00 : bf16
    %4 = vector.broadcast %cst : bf16 to vector<32x128xbf16>
    %5 = vector.shape_cast %3 : vector<32x1xi1> to vector<32x1xi1>
    %6 = vector.broadcast %5 : vector<32x1xi1> to vector<32x128xi1>
    %7 = arith.select %6, %0, %4 : vector<32x128xi1>, vector<32x128xbf16>
    %c1_i32 = arith.constant 1 : i32
    %8 = vector.broadcast %c1_i32 : i32 to vector<32x1xi32>
    %9 = arith.cmpi eq, %1, %8 : vector<32x1xi32>
    %cst_3 = arith.constant 0.000000e+00 : bf16
    %10 = vector.broadcast %cst_3 : bf16 to vector<32x128xbf16>
    %11 = vector.shape_cast %9 : vector<32x1xi1> to vector<32x1xi1>
    %12 = vector.broadcast %11 : vector<32x1xi1> to vector<32x128xi1>
    %13 = arith.select %12, %0, %10 : vector<32x128xi1>, vector<32x128xbf16>
    %c2_i32 = arith.constant 2 : i32
    %14 = vector.broadcast %c2_i32 : i32 to vector<32x1xi32>
    %15 = arith.cmpi eq, %1, %14 : vector<32x1xi32>
    %cst_4 = arith.constant 0.000000e+00 : bf16
    %16 = vector.broadcast %cst_4 : bf16 to vector<32x128xbf16>
    %17 = vector.shape_cast %15 : vector<32x1xi1> to vector<32x1xi1>
    %18 = vector.broadcast %17 : vector<32x1xi1> to vector<32x128xi1>
    %19 = arith.select %18, %0, %16 : vector<32x128xi1>, vector<32x128xbf16>
    %20 = tpu.concatenate %7, %13, %19 in 1 : vector<32x128xbf16>, vector<32x128xbf16>, vector<32x128xbf16> -> vector<32x384xbf16>
    %c0_5 = arith.constant 0 : index
    %c0_6 = arith.constant 0 : index
    %21 = vector.load %arg3[%c0_5, %c0_6] : memref<384x128xbf16, #tpu.memory_space<vmem>>, vector<384x128xbf16>
    %cst_7 = arith.constant dense<0.000000e+00> : vector<32x128xf32>
    %22 = tpu.matmul %20, %21, %cst_7 {dimension_numbers = #tpu.dot_dimension_numbers<[1], [0], [0], [1], [0, 0, 1, 1], [], []>} : vector<32x384xbf16>, vector<384x128xbf16>, vector<32x128xf32> -> vector<32x128xf32>
    %cst_8 = arith.constant 0.000000e+00 : f32
    %23 = vector.broadcast %cst_8 : f32 to vector<32x128xf32>
    %24 = arith.maximumf %22, %23 : vector<32x128xf32>
    %25 = arith.truncf %24 : vector<32x128xf32> to vector<32x128xbf16>
    %c0_9 = arith.constant 0 : index
    %c0_10 = arith.constant 0 : index
    %26 = vector.load %arg4[%c0_9, %c0_10] : memref<32x128xbf16, #tpu.memory_space<vmem>>, vector<32x128xbf16>
    tpu.vector_store %arg4[%c0_9, %c0_10], %25 {strides = array<i32>} : memref<32x128xbf16, #tpu.memory_space<vmem>>, vector<32x128xbf16>,
    return
  }
  func.func @transform_0(%arg0: i32) -> (i32, i32) {
    %c0_i32 = arith.constant 0 : i32
    %c0_i32_0 = arith.constant 0 : i32
    return %arg0, %c0_i32 : i32, i32
  }
  func.func @transform_1(%arg0: i32) -> (i32, i32) {
    %c0_i32 = arith.constant 0 : i32
    %c0_i32_0 = arith.constant 0 : i32
    return %arg0, %c0_i32 : i32, i32
  }
  func.func @transform_2(%arg0: i32) -> (i32, i32) {
    %c0_i32 = arith.constant 0 : i32
    %c0_i32_0 = arith.constant 0 : i32
    %c0_i32_1 = arith.constant 0 : i32
    return %c0_i32, %c0_i32_0 : i32, i32
  }
  func.func @transform_3(%arg0: i32) -> (i32, i32) {
    %c0_i32 = arith.constant 0 : i32
    %c0_i32_0 = arith.constant 0 : i32
    return %arg0, %c0_i32 : i32, i32
  }
}

</mosaic_0001>

<llo_original>
// kernel: tpu_custom_call.1
$region0: #{tpu_custom_call.1}
  #allocation0 [shape = 'u32[]', space=smem, size = 0x4, offset = 0x4, fixed_abs, tag = 'smem constant byte address 0x4 - core index']
  #allocation1 [shape = 'u32[72,128]{1,0:T(1,128)}', space=vmem, size = 0x9000, scoped, tag = 'internal scratch']
  %s0 = inlined_call_operand.vmem [shape: s32[32,1], index: 0, kind: input, shape index: {}]
  %s1 = inlined_call_operand.vmem [shape: bf16[32,128], index: 1, kind: input, shape index: {}]
  %s2 = inlined_call_operand.hbm [shape: bf16[384,128], index: 2, kind: input, shape index: {}]
  %s3 = inlined_call_operand.hbm [shape: bf16[32,128], index: 3, kind: output, shape index: {}]
  %s4 = sld [smem:[#allocation0]]
  $region26: #{tpu_custom_call.1} parent=0
    _
  %s6 = ssub.s32 1, %s4
  %s7 = scalar_select 0, %s6, %s4
  $region1: #{tpu_custom_call.1} parent=0
    #allocation2 [shape = 'u8[98304]{0}', space=vmem, size = 0x18000, scoped, tag = 'input window, operand 2, single buffered']
    #allocation3 [shape = 's32[1]{0}', space=sflag, size = 0x4, scoped, tag = 'scoped memory for tpu_custom_call.1']
    #allocation4 [shape = 's32[1]{0}', space=sflag, size = 0x4, scoped, tag = 'scoped memory for tpu_custom_call.1']
    #allocation5 [shape = 'u8[8192]{0}', space=vmem, size = 0x2000, scoped, tag = 'output window, operand 0, single buffered']
    %8 = vsyncpa [#allocation3], 0
    %9 = vsyncpa [#allocation4], 0
    // Predicated region
    $region2: #{tpu_custom_call.1} parent=1 // pred_check
      _
    $region3: #{tpu_custom_call.1} parent=1 // pred_check_branch
      %11 = sbr.rel (0) target = $region5
    $region4: #{tpu_custom_call.1} parent=1 // pred_region
      _
    $region5: #{tpu_custom_call.1} parent=1 // pred_fallthru
      _
    // Predicated region
    $region6: #{tpu_custom_call.1} parent=1 // pred_check
      _
    $region7: #{tpu_custom_call.1} parent=1 // pred_check_branch
      %13 = sbr.rel (0) target = $region9
    $region8: #{tpu_custom_call.1} parent=1 // pred_region
      _
    $region9: #{tpu_custom_call.1} parent=1 // pred_fallthru
      _
    // Predicated region
    $region10: #{tpu_custom_call.1} parent=1 // pred_check
      _
    $region11: #{tpu_custom_call.1} parent=1 // pred_check_branch
      %15 = sbr.rel (0) target = $region13
    $region12: #{tpu_custom_call.1} parent=1 // pred_region
      %17 = vsyncadd [#allocation3], 0
      %s18 = sshll.u32 %s2, 4
      %s19 = int_to_ptr.hbm [resolvable:$true] %s18
      %s20 = sshll.u32 [#allocation2], 4
      %s21 = int_to_ptr.vmem [resolvable:$true] %s20
      %26 = dma.hbm_to_vmem [thread:$0]  %s19, 3072, %s21, [#allocation3], 64, 64, 4
    $region13: #{tpu_custom_call.1} parent=1 // pred_fallthru
      _
    // Predicated region
    $region14: #{tpu_custom_call.1} parent=1 // pred_check
      _
    $region15: #{tpu_custom_call.1} parent=1 // pred_check_branch
      %28 = sbr.rel (0) target = $region17
    $region16: #{tpu_custom_call.1} parent=1 // pred_region
      %30 = dma.done [#allocation3], 3072
    $region17: #{tpu_custom_call.1} parent=1 // pred_fallthru
      _
    %v32 = vld [vmem:[%s1] sm:$0xf]
    %v33 = vld [vmem:[%s1 + $0x4] sm:$0xf]
    %v34 = vld [vmem:[%s1 + $0x8] sm:$0xf]
    %v35 = vld [vmem:[%s1 + $0xc] sm:$0xf]
    %v36 = vld [vmem:[%s0] sm:$0xff]
    %v37 = vld [vmem:[%s0 + $0x8] sm:$0xff]
    %v38 = vld [vmem:[%s0 + $0x10] sm:$0xff]
    %v39 = vld [vmem:[%s0 + $0x18] sm:$0xff]
    %vm40 = vcmp.eq.s32.totalorder %v36, 0
    %vm41 = vcmp.eq.s32.totalorder %v37, 0
    %vm42 = vcmp.eq.s32.totalorder %v38, 0
    %vm43 = vcmp.eq.s32.totalorder %v39, 0
    %v44 = vsel %vm40, 1, 0
    %v45 = vsel %vm41, 1, 0
    %v46 = vsel %vm42, 1, 0
    %v47 = vsel %vm43, 1, 0
    %48 = vset.pattern.permute.xlu0 0
    %49 = vperm.xlu0 %48, %v44
    %v50 = vpop.permute.xlu0 %49
    %51 = vset.pattern.permute.xlu0 0
    %52 = vperm.xlu0 %51, %v45
    %v53 = vpop.permute.xlu0 %52
    %54 = vset.pattern.permute.xlu0 0
    %55 = vperm.xlu0 %54, %v46
    %v56 = vpop.permute.xlu0 %55
    %57 = vset.pattern.permute.xlu0 0
    %58 = vperm.xlu0 %57, %v47
    %v59 = vpop.permute.xlu0 %58
    %vm60 = vcmp.eq.s32.totalorder %v50, 1
    %vm61 = vcmp.eq.s32.totalorder %v53, 1
    %vm62 = vcmp.eq.s32.totalorder %v56, 1
    %vm63 = vcmp.eq.s32.totalorder %v59, 1
    %vm64 = vmpackc.low %vm60, %vm60
    %vm65 = vmpackc.low %vm61, %vm61
    %vm66 = vmpackc.low %vm62, %vm62
    %vm67 = vmpackc.low %vm63, %vm63
    %v68 = vsel %vm64, %v32, 0
    %v69 = vsel %vm65, %v33, 0
    %v70 = vsel %vm66, %v34, 0
    %v71 = vsel %vm67, %v35, 0
    %vm72 = vcmp.eq.s32.totalorder %v36, 1
    %vm73 = vcmp.eq.s32.totalorder %v37, 1
    %vm74 = vcmp.eq.s32.totalorder %v38, 1
    %vm75 = vcmp.eq.s32.totalorder %v39, 1
    %v76 = vsel %vm72, 1, 0
    %v77 = vsel %vm73, 1, 0
    %v78 = vsel %vm74, 1, 0
    %v79 = vsel %vm75, 1, 0
    %80 = vset.pattern.permute.xlu0 0
    %81 = vperm.xlu0 %80, %v76
    %v82 = vpop.permute.xlu0 %81
    %83 = vset.pattern.permute.xlu0 0
    %84 = vperm.xlu0 %83, %v77
    %v85 = vpop.permute.xlu0 %84
    %86 = vset.pattern.permute.xlu0 0
    %87 = vperm.xlu0 %86, %v78
    %v88 = vpop.permute.xlu0 %87
    %89 = vset.pattern.permute.xlu0 0
    %90 = vperm.xlu0 %89, %v79
    %v91 = vpop.permute.xlu0 %90
    %vm92 = vcmp.eq.s32.totalorder %v82, 1
    %vm93 = vcmp.eq.s32.totalorder %v85, 1
    %vm94 = vcmp.eq.s32.totalorder %v88, 1
    %vm95 = vcmp.eq.s32.totalorder %v91, 1
    %vm96 = vmpackc.low %vm92, %vm92
    %vm97 = vmpackc.low %vm93, %vm93
    %vm98 = vmpackc.low %vm94, %vm94
    %vm99 = vmpackc.low %vm95, %vm95
    %v100 = vsel %vm96, %v32, 0
    %v101 = vsel %vm97, %v33, 0
    %v102 = vsel %vm98, %v34, 0
    %v103 = vsel %vm99, %v35, 0
    %vm104 = vcmp.eq.s32.totalorder %v36, 2
    %vm105 = vcmp.eq.s32.totalorder %v37, 2
    %vm106 = vcmp.eq.s32.totalorder %v38, 2
    %vm107 = vcmp.eq.s32.totalorder %v39, 2
    %v108 = vsel %vm104, 1, 0
    %v109 = vsel %vm105, 1, 0
    %v110 = vsel %vm106, 1, 0
    %v111 = vsel %vm107, 1, 0
    %112 = vset.pattern.permute.xlu0 0
    %113 = vperm.xlu0 %112, %v108
    %v114 = vpop.permute.xlu0 %113
    %115 = vset.pattern.permute.xlu0 0
    %116 = vperm.xlu0 %115, %v109
    %v117 = vpop.permute.xlu0 %116
    %118 = vset.pattern.permute.xlu0 0
    %119 = vperm.xlu0 %118, %v110
    %v120 = vpop.permute.xlu0 %119
    %121 = vset.pattern.permute.xlu0 0
    %122 = vperm.xlu0 %121, %v111
    %v123 = vpop.permute.xlu0 %122
    %vm124 = vcmp.eq.s32.totalorder %v114, 1
    %vm125 = vcmp.eq.s32.totalorder %v117, 1
    %vm126 = vcmp.eq.s32.totalorder %v120, 1
    %vm127 = vcmp.eq.s32.totalorder %v123, 1
    %vm128 = vmpackc.low %vm124, %vm124
    %vm129 = vmpackc.low %vm125, %vm125
    %vm130 = vmpackc.low %vm126, %vm126
    %vm131 = vmpackc.low %vm127, %vm127
    %v132 = vsel %vm128, %v32, 0
    %v133 = vsel %vm129, %v33, 0
    %v134 = vsel %vm130, %v34, 0
    %v135 = vsel %vm131, %v35, 0
    %v140 = vunpack.c.l.b16 %v68
    %v141 = vunpack.c.l.b16 %v69
    %v142 = vunpack.c.l.b16 %v70
    %v143 = vunpack.c.l.b16 %v71
    %v144 = vpack.c.b16 %v141, %v140
    %v145 = vpack.c.b16 %v143, %v142
    %v152 = vunpack.c.l.b16 %v100
    %v153 = vunpack.c.l.b16 %v101
    %v154 = vunpack.c.l.b16 %v102
    %v155 = vunpack.c.l.b16 %v103
    %v156 = vpack.c.b16 %v153, %v152
    %v157 = vpack.c.b16 %v155, %v154
    %v164 = vunpack.c.l.b16 %v132
    %v165 = vunpack.c.l.b16 %v133
    %v166 = vunpack.c.l.b16 %v134
    %v167 = vunpack.c.l.b16 %v135
    %v168 = vpack.c.b16 %v165, %v164
    %v169 = vpack.c.b16 %v167, %v166
    %v172 = vld [vmem:[#allocation2] sm:$0xf]
    %v173 = vld [vmem:[#allocation2 + $0x4] sm:$0xf]
    %v174 = vld [vmem:[#allocation2 + $0x8] sm:$0xf]
    %v175 = vld [vmem:[#allocation2 + $0xc] sm:$0xf]
    %v176 = vld [vmem:[#allocation2 + $0x10] sm:$0xf]
    %v177 = vld [vmem:[#allocation2 + $0x14] sm:$0xf]
    %v178 = vld [vmem:[#allocation2 + $0x18] sm:$0xf]
    %v179 = vld [vmem:[#allocation2 + $0x1c] sm:$0xf]
    %v180 = vld [vmem:[#allocation2 + $0x20] sm:$0xf]
    %v181 = vld [vmem:[#allocation2 + $0x24] sm:$0xf]
    %v182 = vld [vmem:[#allocation2 + $0x28] sm:$0xf]
    %v183 = vld [vmem:[#allocation2 + $0x2c] sm:$0xf]
    %v184 = vld [vmem:[#allocation2 + $0x30] sm:$0xf]
    %v185 = vld [vmem:[#allocation2 + $0x34] sm:$0xf]
    %v186 = vld [vmem:[#allocation2 + $0x38] sm:$0xf]
    %v187 = vld [vmem:[#allocation2 + $0x3c] sm:$0xf]
    %v188 = vld [vmem:[#allocation2 + $0x40] sm:$0xf]
    %v189 = vld [vmem:[#allocation2 + $0x44] sm:$0xf]
    %v190 = vld [vmem:[#allocation2 + $0x48] sm:$0xf]
    %v191 = vld [vmem:[#allocation2 + $0x4c] sm:$0xf]
    %v192 = vld [vmem:[#allocation2 + $0x50] sm:$0xf]
    %v193 = vld [vmem:[#allocation2 + $0x54] sm:$0xf]
    %v194 = vld [vmem:[#allocation2 + $0x58] sm:$0xf]
    %v195 = vld [vmem:[#allocation2 + $0x5c] sm:$0xf]
    %v196 = vld [vmem:[#allocation2 + $0x60] sm:$0xf]
    %v197 = vld [vmem:[#allocation2 + $0x64] sm:$0xf]
    %v198 = vld [vmem:[#allocation2 + $0x68] sm:$0xf]
    %v199 = vld [vmem:[#allocation2 + $0x6c] sm:$0xf]
    %v200 = vld [vmem:[#allocation2 + $0x70] sm:$0xf]
    %v201 = vld [vmem:[#allocation2 + $0x74] sm:$0xf]
    %v202 = vld [vmem:[#allocation2 + $0x78] sm:$0xf]
    %v203 = vld [vmem:[#allocation2 + $0x7c] sm:$0xf]
    %v204 = vld [vmem:[#allocation2 + $0x80] sm:$0xf]
    %v205 = vld [vmem:[#allocation2 + $0x84] sm:$0xf]
    %v206 = vld [vmem:[#allocation2 + $0x88] sm:$0xf]
    %v207 = vld [vmem:[#allocation2 + $0x8c] sm:$0xf]
    %v208 = vld [vmem:[#allocation2 + $0x90] sm:$0xf]
    %v209 = vld [vmem:[#allocation2 + $0x94] sm:$0xf]
    %v210 = vld [vmem:[#allocation2 + $0x98] sm:$0xf]
    %v211 = vld [vmem:[#allocation2 + $0x9c] sm:$0xf]
    %v212 = vld [vmem:[#allocation2 + $0xa0] sm:$0xf]
    %v213 = vld [vmem:[#allocation2 + $0xa4] sm:$0xf]
    %v214 = vld [vmem:[#allocation2 + $0xa8] sm:$0xf]
    %v215 = vld [vmem:[#allocation2 + $0xac] sm:$0xf]
    %v216 = vld [vmem:[#allocation2 + $0xb0] sm:$0xf]
    %v217 = vld [vmem:[#allocation2 + $0xb4] sm:$0xf]
    %v218 = vld [vmem:[#allocation2 + $0xb8] sm:$0xf]
    %v219 = vld [vmem:[#allocation2 + $0xbc] sm:$0xf]
    %v268 = vunpack.c.l.b16 %v172
    %v269 = vunpack.c.l.b16 %v173
    %v270 = vunpack.c.l.b16 %v174
    %v271 = vunpack.c.l.b16 %v175
    %v272 = vunpack.c.l.b16 %v176
    %v273 = vunpack.c.l.b16 %v177
    %v274 = vunpack.c.l.b16 %v178
    %v275 = vunpack.c.l.b16 %v179
    %v276 = vunpack.c.l.b16 %v180
    %v277 = vunpack.c.l.b16 %v181
    %v278 = vunpack.c.l.b16 %v182
    %v279 = vunpack.c.l.b16 %v183
    %v280 = vunpack.c.l.b16 %v184
    %v281 = vunpack.c.l.b16 %v185
    %v282 = vunpack.c.l.b16 %v186
    %v283 = vunpack.c.l.b16 %v187
    %v284 = vunpack.c.l.b16 %v188
    %v285 = vunpack.c.l.b16 %v189
    %v286 = vunpack.c.l.b16 %v190
    %v287 = vunpack.c.l.b16 %v191
    %v288 = vunpack.c.l.b16 %v192
    %v289 = vunpack.c.l.b16 %v193
    %v290 = vunpack.c.l.b16 %v194
    %v291 = vunpack.c.l.b16 %v195
    %v292 = vunpack.c.l.b16 %v196
    %v293 = vunpack.c.l.b16 %v197
    %v294 = vunpack.c.l.b16 %v198
    %v295 = vunpack.c.l.b16 %v199
    %v296 = vunpack.c.l.b16 %v200
    %v297 = vunpack.c.l.b16 %v201
    %v298 = vunpack.c.l.b16 %v202
    %v299 = vunpack.c.l.b16 %v203
    %v300 = vunpack.c.l.b16 %v204
    %v301 = vunpack.c.l.b16 %v205
    %v302 = vunpack.c.l.b16 %v206
    %v303 = vunpack.c.l.b16 %v207
    %v304 = vunpack.c.l.b16 %v208
    %v305 = vunpack.c.l.b16 %v209
    %v306 = vunpack.c.l.b16 %v210
    %v307 = vunpack.c.l.b16 %v211
    %v308 = vunpack.c.l.b16 %v212
    %v309 = vunpack.c.l.b16 %v213
    %v310 = vunpack.c.l.b16 %v214
    %v311 = vunpack.c.l.b16 %v215
    %v312 = vunpack.c.l.b16 %v216
    %v313 = vunpack.c.l.b16 %v217
    %v314 = vunpack.c.l.b16 %v218
    %v315 = vunpack.c.l.b16 %v219
    %v316 = vpack.c.b16 %v269, %v268
    %v317 = vpack.c.b16 %v271, %v270
    %v318 = vpack.c.b16 %v273, %v272
    %v319 = vpack.c.b16 %v275, %v274
    %v320 = vpack.c.b16 %v277, %v276
    %v321 = vpack.c.b16 %v279, %v278
    %v322 = vpack.c.b16 %v281, %v280
    %v323 = vpack.c.b16 %v283, %v282
    %v324 = vpack.c.b16 %v285, %v284
    %v325 = vpack.c.b16 %v287, %v286
    %v326 = vpack.c.b16 %v289, %v288
    %v327 = vpack.c.b16 %v291, %v290
    %v328 = vpack.c.b16 %v293, %v292
    %v329 = vpack.c.b16 %v295, %v294
    %v330 = vpack.c.b16 %v297, %v296
    %v331 = vpack.c.b16 %v299, %v298
    %v332 = vpack.c.b16 %v301, %v300
    %v333 = vpack.c.b16 %v303, %v302
    %v334 = vpack.c.b16 %v305, %v304
    %v335 = vpack.c.b16 %v307, %v306
    %v336 = vpack.c.b16 %v309, %v308
    %v337 = vpack.c.b16 %v311, %v310
    %v338 = vpack.c.b16 %v313, %v312
    %v339 = vpack.c.b16 %v315, %v314
    %364 = vmatpush.bf16.msra.mxu0 %v323
    %365 = vmatpush.bf16.msra.mxu0 %v322
    %366 = vmatpush.bf16.msra.mxu0 %v321
    %367 = vmatpush.bf16.msra.mxu0 %v320
    %368 = vmatpush.bf16.msra.mxu0 %v319
    %369 = vmatpush.bf16.msra.mxu0 %v318
    %370 = vmatpush.bf16.msra.mxu0 %v317
    %371 = vmatpush.bf16.msra.mxu0 %v316
    %372 = vmatmul.bf16.gmra.mxu0 %v144
    %v373 = vpop.f32.mrf.mxu0
    %v374 = vadd.f32 0.0, %v373
    %v375 = vpop.f32.mrf.mxu0
    %v376 = vadd.f32 0.0, %v375
    %377 = vmatmul.bf16.gmra.mxu0 %v145
    %v378 = vpop.f32.mrf.mxu0
    %v379 = vadd.f32 0.0, %v378
    %v380 = vpop.f32.mrf.mxu0
    %v381 = vadd.f32 0.0, %v380
    %382 = vdwg.mxu0
    %383 = vmatpush.bf16.msra.mxu0 %v331
    %384 = vmatpush.bf16.msra.mxu0 %v330
    %385 = vmatpush.bf16.msra.mxu0 %v329
    %386 = vmatpush.bf16.msra.mxu0 %v328
    %387 = vmatpush.bf16.msra.mxu0 %v327
    %388 = vmatpush.bf16.msra.mxu0 %v326
    %389 = vmatpush.bf16.msra.mxu0 %v325
    %390 = vmatpush.bf16.msra.mxu0 %v324
    %391 = vmatmul.bf16.gmra.mxu0 %v156
    %v392 = vpop.f32.mrf.mxu0
    %v393 = vadd.f32 %v374, %v392
    %v394 = vpop.f32.mrf.mxu0
    %v395 = vadd.f32 %v376, %v394
    %396 = vmatmul.bf16.gmra.mxu0 %v157
    %v397 = vpop.f32.mrf.mxu0
    %v398 = vadd.f32 %v379, %v397
    %v399 = vpop.f32.mrf.mxu0
    %v400 = vadd.f32 %v381, %v399
    %401 = vdwg.mxu0
    %402 = vmatpush.bf16.msra.mxu0 %v339
    %403 = vmatpush.bf16.msra.mxu0 %v338
    %404 = vmatpush.bf16.msra.mxu0 %v337
    %405 = vmatpush.bf16.msra.mxu0 %v336
    %406 = vmatpush.bf16.msra.mxu0 %v335
    %407 = vmatpush.bf16.msra.mxu0 %v334
    %408 = vmatpush.bf16.msra.mxu0 %v333
    %409 = vmatpush.bf16.msra.mxu0 %v332
    %410 = vmatmul.bf16.gmra.mxu0 %v168
    %v411 = vpop.f32.mrf.mxu0
    %v412 = vadd.f32 %v393, %v411
    %v413 = vpop.f32.mrf.mxu0
    %v414 = vadd.f32 %v395, %v413
    %415 = vmatmul.bf16.gmra.mxu0 %v169
    %v416 = vpop.f32.mrf.mxu0
    %v417 = vadd.f32 %v398, %v416
    %v418 = vpop.f32.mrf.mxu0
    %v419 = vadd.f32 %v400, %v418
    %420 = vdwg.mxu0
    %v421 = vmax.f32 %v412, 0.0
    %v422 = vmax.f32 %v414, 0.0
    %v423 = vmax.f32 %v417, 0.0
    %v424 = vmax.f32 %v419, 0.0
    %v425 = vpack.c.bf16 %v421, %v421
    %v426 = vpack.c.bf16 %v422, %v422
    %v427 = vpack.c.bf16 %v423, %v423
    %v428 = vpack.c.bf16 %v424, %v424
    %429 = vst [vmem:[#allocation5] sm:$0xf] %v425
    %430 = vst [vmem:[#allocation5 + $0x4] sm:$0xf] %v426
    %431 = vst [vmem:[#allocation5 + $0x8] sm:$0xf] %v427
    %432 = vst [vmem:[#allocation5 + $0xc] sm:$0xf] %v428
    // Predicated region
    $region18: #{tpu_custom_call.1} parent=1 // pred_check
      _
    $region19: #{tpu_custom_call.1} parent=1 // pred_check_branch
      %434 = sbr.rel (0) target = $region21
    $region20: #{tpu_custom_call.1} parent=1 // pred_region
      %436 = vsyncadd [#allocation4], 0
      %s437 = sshll.u32 [#allocation5], 4
      %s438 = int_to_ptr.vmem [resolvable:$true] %s437
      %s439 = sshll.u32 %s3, 4
      %s440 = int_to_ptr.hbm [resolvable:$true] %s439
      %445 = dma.vmem_to_hbm [thread:$0]  %s438, 256, %s440, [#allocation4], 64, 64, 4
    $region21: #{tpu_custom_call.1} parent=1 // pred_fallthru
      _
    // Predicated region
    $region22: #{tpu_custom_call.1} parent=1 // pred_check
      _
    $region23: #{tpu_custom_call.1} parent=1 // pred_check_branch
      %447 = sbr.rel (0) target = $region25
    $region24: #{tpu_custom_call.1} parent=1 // pred_region
      %449 = dma.done [#allocation4], 256
    $region25: #{tpu_custom_call.1} parent=1 // pred_fallthru
      _
    %450 = vsyncpa [#allocation3], 1
    %451 = vsyncpa [#allocation4], 1

</llo_original>
